<compile_context>
chip_gen: v6e
topology: v6e:2x2x1
jax: 0.10.0
libtpu: 0.0.40
codegen_flags: <defaults>
</compile_context>

<pallas_src>
import math

import jax
import jax.numpy as jnp
from jax.experimental import pallas as pl
from jax.experimental.pallas import tpu as pltpu

# Leading "parallel" grid axis: shards the batch stream across the two
# TensorCores on v7x; serializes for free on single-TC v5e/v6e.
_NUM_CORE_SPLITS = 2


def _cdiv(a: int, b: int) -> int:
    return (a + b - 1) // b


def _round_up(x: int, m: int) -> int:
    return (x + m - 1) // m * m


def _vmem_capacity_bytes() -> int:
    """Physical VMEM capacity of the local TPU (conservative fallback = v7x 64 MiB)."""
    try:
        info = pltpu.get_tpu_info()
        cap = getattr(info, "vmem_capacity_bytes", None)
        if cap:
            return int(cap)
    except Exception:
        pass
    return 64 * 1024 * 1024


def _make_accumulate_kernel(n_states: int):
    def kernel(features_ref, labels_ref, partial_ref):
        step = pl.program_id(1)

        @pl.when(step == 0)
        def _init():
            # Fresh resident output block for this core split.
            partial_ref[...] = jnp.zeros_like(partial_ref)

        feats = features_ref[...]                       # (TILE_N, D) f32
        labels = labels_ref[...]                        # (1, TILE_N) i32
        tile_n = feats.shape[0]

        # Transposed one-hot mask: mask_t[s, t] = (labels[t] == s).
        proxy = jax.lax.broadcasted_iota(jnp.int32, (n_states, tile_n), 0)
        mask_t = (labels == proxy).astype(jnp.float32)  # (S, TILE_N)

        # Un-normalized prototype partial: (S, TILE_N) @ (TILE_N, D) on the MXU.
        partial = jax.lax.dot_general(
            mask_t, feats,
            dimension_numbers=(((1,), (0,)), ((), ())),
            preferred_element_type=jnp.float32,
        )                                               # (S, D)
        partial_ref[...] += partial[None, :, :]

    return kernel


def _make_finalize_kernel(n_states: int, scaling_temperature: float):
    inv_temp = 1.0 / float(scaling_temperature)
    # Compile-time constant log(S - 1); -inf for S == 1 (NaN propagates like torch).
    log_den = math.log(n_states - 1) if n_states > 1 else float("-inf")

    def kernel(partials_ref, protos_ref, disloss_ref):
        protos = jnp.sum(partials_ref[...], axis=0)     # (S, D) combine core partials

        # Row-wise L2 normalization (F.normalize per row, eps=1e-12 clamp on the
        # norm  ==  rsqrt of sum-of-squares clamped at 1e-24).
        sumsq = jnp.sum(protos * protos, axis=1, keepdims=True)
        inv_norm = jax.lax.rsqrt(jnp.maximum(sumsq, 1e-24))
        protos_n = protos * inv_norm
        protos_ref[...] = protos_n.astype(protos_ref.dtype)

        # Dispersion loss.
        logits = jax.lax.dot_general(
            protos_n, protos_n,
            dimension_numbers=(((1,), (1,)), ((), ())),
            preferred_element_type=jnp.float32,
        ) * inv_temp                                    # (S, S)

        row_ids = jax.lax.broadcasted_iota(jnp.int32, (n_states, n_states), 0)
        col_ids = jax.lax.broadcasted_iota(jnp.int32, (n_states, n_states), 1)
        offdiag = (row_ids != col_ids).astype(jnp.float32)      # 1 - eye

        num = jnp.sum(offdiag * jnp.exp(logits), axis=1)        # (S,)
        mean_prob_neg = jnp.log(num) - log_den                  # == log(num / (S-1))

        # Drop NaNs (as in torch: mean_prob_neg[~isnan].mean()).
        valid = jnp.logical_not(jnp.isnan(mean_prob_neg))
        vcount = jnp.sum(valid.astype(jnp.float32))
        vsum = jnp.sum(jnp.where(valid, mean_prob_neg, 0.0))
        # NOTE: vcount == 0 (e.g. n_states == 1) yields NaN, matching torch's
        # mean over an empty tensor.
        disloss_ref[0, 0] = vsum / vcount

    return kernel


def prototypes_forward(features, labels, n_states, scaling_temperature=0.1,
                       tile_n=None):
    """features: [N, D] f32, labels: [N] i32 -> (prototypes [S, D], disloss scalar)."""
    features = features.astype(jnp.float32)
    labels = labels.astype(jnp.int32)
    n, d = features.shape

    lane_d = max(_round_up(d, 128), 128)    # f32 minor-dim lane padding in HBM/VMEM
    n128 = _round_up(max(n, 1), 128)
    vmem_cap = _vmem_capacity_bytes()

    # --- VMEM-budget-driven tile selection (always a multiple of 128) ---------
    if tile_n is not None:
        tile = max(128, _round_up(int(tile_n), 128))
    else:
        # ~8 MiB per features block, capped so double-buffering + temporaries
        # comfortably fit v7x's 64 MiB VMEM as well as v5e/v6e's 128 MiB.
        per_block_budget = max(2 << 20, min(8 << 20, vmem_cap // 10))
        tile = max(128, (per_block_budget // (lane_d * 4)) // 128 * 128)
    # Do not over-tile small problems: aim for at least _NUM_CORE_SPLITS tiles.
    tile = min(tile, _round_up(_cdiv(n128, _NUM_CORE_SPLITS), 128))

    num_tiles = _round_up(_cdiv(n128, tile), _NUM_CORE_SPLITS)
    tiles_per_core = num_tiles // _NUM_CORE_SPLITS
    n_pad = num_tiles * tile

    if n_pad != n:
        features = jnp.pad(features, ((0, n_pad - n), (0, 0)))
        # Out-of-range label -> zero one-hot row -> no contribution.
        labels = jnp.pad(labels, (0, n_pad - n), constant_values=n_states)
    labels_lane = labels.reshape(1, n_pad)              # lane-major labels

    # --- scoped-VMEM limit covering double-buffered blocks + temporaries ------
    feat_block_bytes = tile * lane_d * 4
    label_block_bytes = 8 * tile * 4                    # (1, tile) i32, sublane-padded
    vmem_needed = 5 * feat_block_bytes + 2 * label_block_bytes + (8 << 20)
    vmem_limit = int(min(int(vmem_cap * 0.85), max(vmem_needed, 32 << 20)))

    accum_cost = pl.CostEstimate(
        flops=2 * n_pad * n_states * d,
        transcendentals=0,
        bytes_accessed=(n_pad * lane_d * 4            # features (lane-padded)
                        + n_pad * 4 * 8               # labels (sublane-padded)
                        + _NUM_CORE_SPLITS * n_states * lane_d * 4),
    )

    partials = pl.pallas_call(
        _make_accumulate_kernel(n_states),
        out_shape=jax.ShapeDtypeStruct((_NUM_CORE_SPLITS, n_states, d), jnp.float32),
        grid=(_NUM_CORE_SPLITS, tiles_per_core),
        in_specs=[
            pl.BlockSpec((tile, d), lambda c, i: (c * tiles_per_core + i, 0)),
            pl.BlockSpec((1, tile), lambda c, i: (0, c * tiles_per_core + i)),
        ],
        out_specs=pl.BlockSpec((1, n_states, d), lambda c, i: (c, 0, 0)),
        compiler_params=pltpu.CompilerParams(
            dimension_semantics=("parallel", "arbitrary"),
            vmem_limit_bytes=vmem_limit),
        cost_estimate=accum_cost,
    )(features, labels_lane)

    finalize_cost = pl.CostEstimate(
        flops=2 * n_states * n_states * d + 8 * n_states * d,
        transcendentals=n_states * n_states + n_states,
        bytes_accessed=(_NUM_CORE_SPLITS + 1) * n_states * lane_d * 4,
    )

    protos, disloss = pl.pallas_call(
        _make_finalize_kernel(n_states, scaling_temperature),
        out_shape=(
            jax.ShapeDtypeStruct((n_states, d), jnp.float32),
            jax.ShapeDtypeStruct((1, 1), jnp.float32),
        ),
        grid=(1,),
        in_specs=[pl.BlockSpec((_NUM_CORE_SPLITS, n_states, d), lambda i: (0, 0, 0))],
        out_specs=(
            pl.BlockSpec((n_states, d), lambda i: (0, 0)),
            pl.BlockSpec(memory_space=pltpu.MemorySpace.SMEM),
        ),
        compiler_params=pltpu.CompilerParams(dimension_semantics=("arbitrary",)),
        cost_estimate=finalize_cost,
    )(partials)

    return protos, disloss[0, 0]


def _reference(features, labels, n_states, scaling_temperature=0.1):
    """Pure-JAX reference mirroring the torch code."""
    mask = (labels[:, None] == jnp.arange(n_states)[None, :]).astype(jnp.float32)
    protos = (features.T @ mask).T
    norm = jnp.sqrt(jnp.sum(protos * protos, axis=1, keepdims=True))
    protos = protos / jnp.maximum(norm, 1e-12)
    logits = protos @ protos.T / scaling_temperature
    off = 1.0 - jnp.eye(n_states)
    mpn = jnp.log(jnp.sum(off * jnp.exp(logits), axis=1) / jnp.sum(off, axis=1))
    valid = ~jnp.isnan(mpn)
    disloss = jnp.sum(jnp.where(valid, mpn, 0.0)) / jnp.sum(valid)
    return protos, disloss


if __name__ == "__main__":
    key = jax.random.PRNGKey(0)
    kf, kl, kf2, kl2, kf3, kl3 = jax.random.split(key, 6)

    # --- small case (auto tile, padded 8 -> 256) ------------------------------
    n_samples, feat_dim, n_states = 8, 32, 4
    features = jax.random.normal(kf, (n_samples, feat_dim), dtype=jnp.float32)
    features = features / jnp.linalg.norm(features, axis=1, keepdims=True)
    labels = jax.random.randint(kl, (n_samples,), 0, n_states, dtype=jnp.int32)

    protos, disloss = prototypes_forward(features, labels, n_states, 0.1)
    jax.block_until_ready((protos, disloss))
    ref_protos, ref_disloss = _reference(features, labels, n_states, 0.1)
    assert jnp.allclose(protos, ref_protos, atol=1e-5, rtol=1e-5)
    assert jnp.allclose(disloss, ref_disloss, atol=1e-4, rtol=1e-4)

    # --- multi-tile case (explicit tile: accumulation over steps + both splits)
    n2, d2, s2 = 300, 32, 5
    feats2 = jax.random.normal(kf2, (n2, d2), dtype=jnp.float32)
    feats2 = feats2 / jnp.linalg.norm(feats2, axis=1, keepdims=True)
    labels2 = jax.random.randint(kl2, (n2,), 0, s2, dtype=jnp.int32)

    protos2, disloss2 = prototypes_forward(feats2, labels2, s2, 0.1, tile_n=128)
    jax.block_until_ready((protos2, disloss2))
    ref_protos2, ref_disloss2 = _reference(feats2, labels2, s2, 0.1)
    assert jnp.allclose(protos2, ref_protos2, atol=1e-5, rtol=1e-5)
    assert jnp.allclose(disloss2, ref_disloss2, atol=1e-4, rtol=1e-4)

    # --- larger case exercising the VMEM-budget auto-tile path ----------------
    n3, d3, s3 = 4096, 32, 6
    feats3 = jax.random.normal(kf3, (n3, d3), dtype=jnp.float32)
    feats3 = feats3 / jnp.linalg.norm(feats3, axis=1, keepdims=True)
    labels3 = jax.random.randint(kl3, (n3,), 0, s3, dtype=jnp.int32)

    protos3, disloss3 = prototypes_forward(feats3, labels3, s3, 0.1)
    jax.block_until_ready((protos3, disloss3))
    ref_protos3, ref_disloss3 = _reference(feats3, labels3, s3, 0.1)
    assert jnp.allclose(protos3, ref_protos3, atol=1e-4, rtol=1e-4)
    assert jnp.allclose(disloss3, ref_disloss3, atol=1e-4, rtol=1e-4)

    print("KERNEL_OK")
</pallas_src>

<mosaic_0001>
module attributes {stable_mosaic.version = 11 : i64} {
  func.func @kernel(%arg0: i32, %arg1: i32, %arg2: memref<128x32xf32, #tpu.memory_space<vmem>>, %arg3: memref<1x128xi32, #tpu.memory_space<vmem>>, %arg4: memref<1x4x32xf32, #tpu.memory_space<vmem>>) attributes {dimension_semantics = [#tpu.dimension_semantics<parallel>, #tpu.dimension_semantics<arbitrary>], iteration_bounds = array<i64: 2, 1>, scalar_prefetch = 0 : i64, scratch_operands = 0 : i64, tpu.core_type = #tpu.core_type<tc>, window_params = [{transform_indices = @transform_0, window_bounds = array<i64: 128, 32>}, {transform_indices = @transform_1, window_bounds = array<i64: 1, 128>}, {transform_indices = @transform_2, window_bounds = array<i64: 1, 4, 32>}]} {
    %c0_i32 = arith.constant 0 : i32
    %0 = arith.cmpi eq, %arg1, %c0_i32 : i32
    %1 = arith.extui %0 : i1 to i32
    %c0_i32_0 = arith.constant 0 : i32
    %2 = arith.cmpi ne, %1, %c0_i32_0 : i32
    scf.if %2 {
      %cst_10 = arith.constant 0.000000e+00 : f32
      %15 = vector.broadcast %cst_10 : f32 to vector<1x4x32xf32>
      %c0_11 = arith.constant 0 : index
      %c0_12 = arith.constant 0 : index
      %c0_13 = arith.constant 0 : index
      %16 = vector.load %arg4[%c0_11, %c0_12, %c0_13] : memref<1x4x32xf32, #tpu.memory_space<vmem>>, vector<1x4x32xf32>
      tpu.vector_store %arg4[%c0_11, %c0_12, %c0_13], %15 {strides = array<i32>} : memref<1x4x32xf32, #tpu.memory_space<vmem>>, vector<1x4x32xf32>,
    } else {
    }
    %c0 = arith.constant 0 : index
    %c0_1 = arith.constant 0 : index
    %3 = vector.load %arg2[%c0, %c0_1] : memref<128x32xf32, #tpu.memory_space<vmem>>, vector<128x32xf32>
    %c0_2 = arith.constant 0 : index
    %c0_3 = arith.constant 0 : index
    %4 = vector.load %arg3[%c0_2, %c0_3] : memref<1x128xi32, #tpu.memory_space<vmem>>, vector<1x128xi32>
    %5 = tpu.iota {dimensions = array<i32: 0>} : vector<4x128xi32>
    %6 = vector.broadcast %4 : vector<1x128xi32> to vector<4x128xi32>
    %7 = arith.cmpi eq, %6, %5 : vector<4x128xi32>
    %8 = arith.extui %7 : vector<4x128xi1> to vector<4x128xi32>
    %9 = arith.sitofp %8 : vector<4x128xi32> to vector<4x128xf32>
    %cst = arith.constant dense<0.000000e+00> : vector<4x32xf32>
    %10 = tpu.matmul %9, %3, %cst {dimension_numbers = #tpu.dot_dimension_numbers<[1], [0], [0], [1], [0, 0, 1, 1], [], []>} : vector<4x128xf32>, vector<128x32xf32>, vector<4x32xf32> -> vector<4x32xf32>
    %c0_4 = arith.constant 0 : index
    %c0_5 = arith.constant 0 : index
    %c0_6 = arith.constant 0 : index
    %11 = vector.load %arg4[%c0_4, %c0_5, %c0_6] : memref<1x4x32xf32, #tpu.memory_space<vmem>>, vector<1x4x32xf32>
    %12 = vector.shape_cast %10 : vector<4x32xf32> to vector<1x4x32xf32>
    %13 = arith.addf %11, %12 : vector<1x4x32xf32>
    %c0_7 = arith.constant 0 : index
    %c0_8 = arith.constant 0 : index
    %c0_9 = arith.constant 0 : index
    %14 = vector.load %arg4[%c0_7, %c0_8, %c0_9] : memref<1x4x32xf32, #tpu.memory_space<vmem>>, vector<1x4x32xf32>
    tpu.vector_store %arg4[%c0_7, %c0_8, %c0_9], %13 {strides = array<i32>} : memref<1x4x32xf32, #tpu.memory_space<vmem>>, vector<1x4x32xf32>,
    return
  }
  func.func @transform_0(%arg0: i32, %arg1: i32) -> (i32, i32) {
    %c1_i32 = arith.constant 1 : i32
    %0 = arith.muli %arg0, %c1_i32 : i32
    %1 = arith.addi %0, %arg1 : i32
    %c0_i32 = arith.constant 0 : i32
    %c0_i32_0 = arith.constant 0 : i32
    return %1, %c0_i32 : i32, i32
  }
  func.func @transform_1(%arg0: i32, %arg1: i32) -> (i32, i32) {
    %c1_i32 = arith.constant 1 : i32
    %0 = arith.muli %arg0, %c1_i32 : i32
    %1 = arith.addi %0, %arg1 : i32
    %c0_i32 = arith.constant 0 : i32
    %c0_i32_0 = arith.constant 0 : i32
    return %c0_i32, %1 : i32, i32
  }
  func.func @transform_2(%arg0: i32, %arg1: i32) -> (i32, i32, i32) {
    %c0_i32 = arith.constant 0 : i32
    %c0_i32_0 = arith.constant 0 : i32
    %c0_i32_1 = arith.constant 0 : i32
    return %arg0, %c0_i32, %c0_i32_0 : i32, i32, i32
  }
}

</mosaic_0001>

<llo_original>
// kernel: tpu_custom_call.1
$region0: #{tpu_custom_call.1}
  #allocation0 [shape = 'u32[]', space=smem, size = 0x4, offset = 0x4, fixed_abs, tag = 'smem constant byte address 0x4 - core index']
  #allocation1 [shape = 'u32[144,128]{1,0:T(1,128)}', space=vmem, size = 0x12000, scoped, tag = 'internal scratch']
  %s0 = inlined_call_operand.vmem [shape: f32[256,32], index: 0, kind: input, shape index: {}]
  %s1 = inlined_call_operand.vmem [shape: s32[1,256], index: 1, kind: input, shape index: {}]
  %s2 = inlined_call_operand.hbm [shape: f32[2,4,32], index: 2, kind: output, shape index: {}]
  %s3 = sld [smem:[#allocation0]]
  $region45: #{tpu_custom_call.1} parent=0
    _
  %s5 = ssub.s32 1, %s3
  %s6 = scalar_select 0, %s5, %s3
  $region1: #{tpu_custom_call.1} parent=0
    #allocation2 [shape = 'u8[4096]{0}', space=vmem, size = 0x1000, scoped, tag = 'output window, operand 0']
    #allocation3 [shape = 's32[2]{0}', space=sflag, size = 0x8, scoped, tag = 'scoped memory for tpu_custom_call.1']
    %7 = vsyncpa [#allocation3], 0
    %s8 = scalar_lea.sflag [#allocation3], 1
    %9 = vsyncpa %s8, 0
    loop: start=0, step=1, limit=4
    $region2: #{tpu_custom_call.1} parent=1 // loop_pre_header
      _
    $region3: #{tpu_custom_call.1} parent=1 // loop_header
      %s11 = sphi 0, %s15
      %p12 = scmp.ge.s32.totalorder %s11, 4
      %s18 = sphi 0, %s30
      %s19 = sphi 0, %s26
      %s20 = sphi 0, %s18
      %s21 = sphi 0, %s19
      %s22 = sphi 0, %s20
      %s23 = sphi 0, %s21
      %s35 = sphi 0, %s37
      %s38 = sphi 0, %s35
      %s39 = sphi 0, %s38
      %s55 = sphi 0, %s39
      %s63 = sphi 0, %s65
      %s66 = sphi 0, %s63
      %s67 = sphi 0, %s66
      %s83 = sphi 0, %s67
      %s89 = sphi 0, %s91
      %s92 = sphi 0, %s89
      %s93 = sphi 0, %s92
      %s109 = sphi 0, %s93
    $region4: #{tpu_custom_call.1} parent=1 // loop_header_branch
      %14 = sbr.rel (%p12) target = $region8
    $region5: #{tpu_custom_call.1} parent=1 // loop_body
      %s16 = ssub.s32 %s11, 1
      %s17 = ssub.s32 %s11, 2
      %s24 = sadd.s32 1, %s19
      %p25 = scmp.ge.s32.totalorder %s24, 1
      %s26 = scalar_select %p25, 0, %s24
      %s27 = sadd.s32 1, %s18
      %s28 = scalar_select %p25, %s27, %s18
      %p29 = scmp.ge.s32.totalorder %s28, 2
      %s30 = scalar_select %p29, 0, %s28
      %s31 = sadd.s32 %s18, %s19
      %s32 = sadd.s32 %s30, %s26
      %s33 = ssub.s32 %s31, %s32
      %p34 = scmp.eq.s32.totalorder %s33, 0
      %s36 = sadd.s32 %s35, 1
      %s37 = scalar_select %p34, %s35, %s36
      %p40 = pneg %p34
      %p41 = scmp.eq.s32.totalorder %s11, 1
      %p42 = por %p40, %p41
      %p43 = scmp.ne.s32.totalorder %s35, %s38
      %p44 = scmp.eq.s32.totalorder %s11, 0
      %p45 = por %p43, %p44
      %p46 = scmp.ne.s32.totalorder %s35, %s38
      %p47 = scmp.eq.s32.totalorder %s16, 1
      %p48 = por %p46, %p47
      %p49 = scmp.ne.s32.totalorder %s38, %s39
      %p50 = scmp.eq.s32.totalorder %s16, 0
      %p51 = por %p49, %p50
      %p52 = scmp.ne.s32.totalorder %s38, %s39
      %p53 = scmp.eq.s32.totalorder %s17, 1
      %p54 = por %p52, %p53
      %p56 = scmp.ne.s32.totalorder %s39, %s55
      %p57 = scmp.eq.s32.totalorder %s17, 0
      %p58 = por %p56, %p57
      %s59 = sadd.s32 %s18, %s19
      %s60 = sadd.s32 %s30, %s26
      %s61 = ssub.s32 %s59, %s60
      %p62 = scmp.eq.s32.totalorder %s61, 0
      %s64 = sadd.s32 %s63, 1
      %s65 = scalar_select %p62, %s63, %s64
      %p68 = pneg %p62
      %p69 = scmp.eq.s32.totalorder %s11, 1
      %p70 = por %p68, %p69
      %p71 = scmp.ne.s32.totalorder %s63, %s66
      %p72 = scmp.eq.s32.totalorder %s11, 0
      %p73 = por %p71, %p72
      %p74 = scmp.ne.s32.totalorder %s63, %s66
      %p75 = scmp.eq.s32.totalorder %s16, 1
      %p76 = por %p74, %p75
      %p77 = scmp.ne.s32.totalorder %s66, %s67
      %p78 = scmp.eq.s32.totalorder %s16, 0
      %p79 = por %p77, %p78
      %p80 = scmp.ne.s32.totalorder %s66, %s67
      %p81 = scmp.eq.s32.totalorder %s17, 1
      %p82 = por %p80, %p81
      %p84 = scmp.ne.s32.totalorder %s67, %s83
      %p85 = scmp.eq.s32.totalorder %s17, 0
      %p86 = por %p84, %p85
      %s87 = ssub.s32 %s18, %s30
      %p88 = scmp.eq.s32.totalorder %s87, 0
      %s90 = sadd.s32 %s89, 1
      %s91 = scalar_select %p88, %s89, %s90
      %p94 = pneg %p88
      %p95 = scmp.eq.s32.totalorder %s11, 1
      %p96 = por %p94, %p95
      %p97 = scmp.ne.s32.totalorder %s89, %s92
      %p98 = scmp.eq.s32.totalorder %s11, 0
      %p99 = por %p97, %p98
      %p100 = scmp.ne.s32.totalorder %s89, %s92
      %p101 = scmp.eq.s32.totalorder %s16, 1
      %p102 = por %p100, %p101
      %p103 = scmp.ne.s32.totalorder %s92, %s93
      %p104 = scmp.eq.s32.totalorder %s16, 0
      %p105 = por %p103, %p104
      %p106 = scmp.ne.s32.totalorder %s92, %s93
      %p107 = scmp.eq.s32.totalorder %s17, 1
      %p108 = por %p106, %p107
      %p110 = scmp.ne.s32.totalorder %s93, %s109
      %p111 = scmp.eq.s32.totalorder %s17, 0
      %p112 = por %p110, %p111
      %p113 = scmp.le.s32.totalorder 1, %s11
      %p114 = scmp.lt.s32.totalorder %s11, 3
      %p115 = pnand %p113, %p114
      %p116 = pneg %p115
      // Predicated region
      $region9: #{tpu_custom_call.1} parent=5 // pred_check
        _
      $region10: #{tpu_custom_call.1} parent=5 // pred_check_branch
        %118 = sbr.rel (%p115) target = $region12
      $region11: #{tpu_custom_call.1} parent=5 // pred_region
        %s119 = ssub.s32 %s11, 1
      $region12: #{tpu_custom_call.1} parent=5 // pred_fallthru
        _
      %p120 = scmp.lt.s32.totalorder %s11, 2
      // Predicated region
      $region13: #{tpu_custom_call.1} parent=5 // pred_check
        %p121 = pneg %p120
      $region14: #{tpu_custom_call.1} parent=5 // pred_check_branch
        %123 = sbr.rel (%p121) target = $region16
      $region15: #{tpu_custom_call.1} parent=5 // pred_region
        // Predicated region
        $region17: #{tpu_custom_call.1} parent=15 // pred_check
          %p124 = pneg %p45
        $region18: #{tpu_custom_call.1} parent=15 // pred_check_branch
          %126 = sbr.rel (%p124) target = $region20
        $region19: #{tpu_custom_call.1} parent=15 // pred_region
          %s127 = sadd.s32 %s18, %s19
          %s128 = smul.u32 16, %s127
          %p129 = scmp.lt.s32.totalorder %s128, 31
          %s130 = scalar_select %p129, %s128, 31
          %s131 = smul.addr %s130, 8
          %s132 = scalar_lea.vmem %s0, %s131
          %s133 = sadd.s32 %s18, %s19
          %s134 = smul.u32 16, %s133
        $region20: #{tpu_custom_call.1} parent=15 // pred_fallthru
          _
        // Predicated region
        $region21: #{tpu_custom_call.1} parent=15 // pred_check
          %p135 = pneg %p73
        $region22: #{tpu_custom_call.1} parent=15 // pred_check_branch
          %137 = sbr.rel (%p135) target = $region24
        $region23: #{tpu_custom_call.1} parent=15 // pred_region
          %s138 = sadd.s32 %s18, %s19
          %p139 = scmp.lt.s32.totalorder %s138, 1
          %s140 = scalar_select %p139, %s138, 1
          %s141 = scalar_lea.vmem %s1, %s140
          %s142 = sadd.s32 %s18, %s19
        $region24: #{tpu_custom_call.1} parent=15 // pred_fallthru
          _
      $region16: #{tpu_custom_call.1} parent=5 // pred_fallthru
        _
      %p143 = scmp.le.s32.totalorder 1, %s11
      %p144 = scmp.lt.s32.totalorder %s11, 3
      %p145 = pnand %p143, %p144
      %p146 = pneg %p145
      // Predicated region
      $region25: #{tpu_custom_call.1} parent=5 // pred_check
        _
      $region26: #{tpu_custom_call.1} parent=5 // pred_check_branch
        %148 = sbr.rel (%p145) target = $region28
      $region27: #{tpu_custom_call.1} parent=5 // pred_region
        %s149 = ssub.s32 %s11, 1
        %s150 = sadd.s32 %s20, %s21
        %s151 = smul.u32 16, %s150
        %p152 = scmp.lt.s32.totalorder %s151, 31
        %s153 = scalar_select %p152, %s151, 31
        %s154 = smul.addr %s153, 8
        %s155 = scalar_lea.vmem %s0, %s154
        %p156 = pneg %p51
        %p157 = pneg %p48
        %s158 = sadd.s32 %s20, %s21
        %p159 = scmp.lt.s32.totalorder %s158, 1
        %s160 = scalar_select %p159, %s158, 1
        %s161 = scalar_lea.vmem %s1, %s160
        %p162 = pneg %p79
        %p163 = pneg %p76
        %p164 = pneg %p105
        %p165 = pneg %p102
        %s166 = sand.u32 %s92, 1
        %s167 = scalar_lea.sflag [#allocation3], %s166
        %s168 = sand.u32 %s92, 1
        %s169 = smul.addr %s168, 4
        %s170 = scalar_lea.vmem [#allocation2], %s169
        %s171 = sadd.s32 %s20, %s21
        %s172 = smul.u32 16, %s171
        %p173 = scmp.lt.s32.totalorder %s172, 31
        %s174 = scalar_select %p173, %s172, 31
        %s175 = smul.addr %s174, 8
        %s176 = scalar_lea.vmem %s0, %s175
        %s177 = sadd.s32 %s20, %s21
        %s178 = smul.u32 16, %s177
        %s179 = sadd.s32 %s20, %s21
        %p180 = scmp.lt.s32.totalorder %s179, 1
        %s181 = scalar_select %p180, %s179, 1
        %s182 = scalar_lea.vmem %s1, %s181
        %s183 = sadd.s32 %s20, %s21
        %p184 = scmp.eq.s32.totalorder %s21, 0
        // Predicated region
        $region29: #{tpu_custom_call.1} parent=27 // pred_check
          %p185 = pneg %p184
        $region30: #{tpu_custom_call.1} parent=27 // pred_check_branch
          %187 = sbr.rel (%p185) target = $region32
        $region31: #{tpu_custom_call.1} parent=27 // pred_region
          %vm188 = vcmask 257024
          %189 = vst.msk [vmem:[%s170] sm:$0xf] %vm188, 0.0
        $region32: #{tpu_custom_call.1} parent=27 // pred_fallthru
          _
        %v190 = vld [vmem:[%s176] sm:$0xff]
        %v191 = vld [vmem:[%s176 + $0x8] sm:$0xff]
        %v192 = vld [vmem:[%s176 + $0x10] sm:$0xff]
        %v193 = vld [vmem:[%s176 + $0x18] sm:$0xff]
        %v194 = vld [vmem:[%s176 + $0x20] sm:$0xff]
        %v195 = vld [vmem:[%s176 + $0x28] sm:$0xff]
        %v196 = vld [vmem:[%s176 + $0x30] sm:$0xff]
        %v197 = vld [vmem:[%s176 + $0x38] sm:$0xff]
        %v198 = vld [vmem:[%s176 + $0x40] sm:$0xff]
        %v199 = vld [vmem:[%s176 + $0x48] sm:$0xff]
        %v200 = vld [vmem:[%s176 + $0x50] sm:$0xff]
        %v201 = vld [vmem:[%s176 + $0x58] sm:$0xff]
        %v202 = vld [vmem:[%s176 + $0x60] sm:$0xff]
        %v203 = vld [vmem:[%s176 + $0x68] sm:$0xff]
        %v204 = vld [vmem:[%s176 + $0x70] sm:$0xff]
        %v205 = vld [vmem:[%s176 + $0x78] sm:$0xff]
        %v206 = vld [vmem:[%s182] sm:$0x1]
        %v207 = vlaneseq
        %v208 = vshrl.u32 %v207, 7
        %v209 = vlaneseq
        %v210 = vshrl.u32 %v209, 7
        %v211 = vsub.s32 0, %v210
        %v212 = vrot.slane %v206, %v211
        %vm213 = vcmp.eq.s32.totalorder %v212, %v208
        %v214 = vsel %vm213, 1, 0
        %v215 = vcvt.s32.f32 %v214
        %216 = vmatprep.subr.mxu0 0.0
        %217 = vmatpush1.msra.mxu0 %v205
        %218 = vmatprep.subr.mxu0 0.0
        %219 = vmatpush1.msra.mxu0 %v204
        %220 = vmatprep.subr.mxu0 0.0
        %221 = vmatpush1.msra.mxu0 %v203
        %222 = vmatprep.subr.mxu0 0.0
        %223 = vmatpush1.msra.mxu0 %v202
        %224 = vmatprep.subr.mxu0 0.0
        %225 = vmatpush1.msra.mxu0 %v201
        %226 = vmatprep.subr.mxu0 0.0
        %227 = vmatpush1.msra.mxu0 %v200
        %228 = vmatprep.subr.mxu0 0.0
        %229 = vmatpush1.msra.mxu0 %v199
        %230 = vmatprep.subr.mxu0 0.0
        %231 = vmatpush1.msra.mxu0 %v198
        %232 = vmatprep.subr.mxu0 0.0
        %233 = vmatpush1.msra.mxu0 %v197
        %234 = vmatprep.subr.mxu0 0.0
        %235 = vmatpush1.msra.mxu0 %v196
        %236 = vmatprep.subr.mxu0 0.0
        %237 = vmatpush1.msra.mxu0 %v195
        %238 = vmatprep.subr.mxu0 0.0
        %239 = vmatpush1.msra.mxu0 %v194
        %240 = vmatprep.subr.mxu0 0.0
        %241 = vmatpush1.msra.mxu0 %v193
        %242 = vmatprep.subr.mxu0 0.0
        %243 = vmatpush1.msra.mxu0 %v192
        %244 = vmatprep.subr.mxu0 0.0
        %245 = vmatpush1.msra.mxu0 %v191
        %246 = vmatprep.subr.mxu0 0.0
        %247 = vmatpush1.msra.mxu0 %v190
        %248 = vmatprep.subr.mxu0 0.0
        %249 = vmatpush2.msra.mxu0 0.0
        %250 = vmatprep.subr.mxu0 0.0
        %251 = vmatpush2.msra.mxu0 0.0
        %252 = vmatprep.subr.mxu0 0.0
        %253 = vmatpush2.msra.mxu0 0.0
        %254 = vmatprep.subr.mxu0 0.0
        %255 = vmatpush2.msra.mxu0 0.0
        %256 = vmatprep.subr.mxu0 0.0
        %257 = vmatpush2.msra.mxu0 0.0
        %258 = vmatprep.subr.mxu0 0.0
        %259 = vmatpush2.msra.mxu0 0.0
        %260 = vmatprep.subr.mxu0 0.0
        %261 = vmatpush2.msra.mxu0 0.0
        %262 = vmatprep.subr.mxu0 0.0
        %263 = vmatpush2.msra.mxu0 0.0
        %264 = vmatprep.subr.mxu0 0.0
        %265 = vmatpush2.msra.mxu0 0.0
        %266 = vmatprep.subr.mxu0 0.0
        %267 = vmatpush2.msra.mxu0 0.0
        %268 = vmatprep.subr.mxu0 0.0
        %269 = vmatpush2.msra.mxu0 0.0
        %270 = vmatprep.subr.mxu0 0.0
        %271 = vmatpush2.msra.mxu0 0.0
        %272 = vmatprep.subr.mxu0 0.0
        %273 = vmatpush2.msra.mxu0 0.0
        %274 = vmatprep.subr.mxu0 0.0
        %275 = vmatpush2.msra.mxu0 0.0
        %276 = vmatprep.subr.mxu0 0.0
        %277 = vmatpush2.msra.mxu0 0.0
        %278 = vmatprep.subr.mxu0 0.0
        %279 = vmatpush2.msra.mxu0 0.0
        %280 = vmatprep.mubr.f32.mxu0 0.0
        %281 = vmatmul.mubr.f32.gmra.mxu0 %v215
        %v282 = vpop.f32.mrf.mxu0
        %v283 = vadd.f32 0.0, %v282
        %v284 = vpop.f32.mrf.mxu0
        %285 = vdwg.mxu0
        %v286 = vld [vmem:[%s170] sm:$0xf]
        %v287 = vadd.f32 %v286, %v283
        %vm288 = vcmask 257024
        %289 = vst.msk [vmem:[%s170] sm:$0xf] %vm288, %v287
        %s290 = sand.u32 %s92, 1
        %s291 = scalar_lea.sflag [#allocation3], %s290
        %s292 = sand.u32 %s92, 1
        %s293 = smul.addr %s292, 4
        %s294 = scalar_lea.vmem [#allocation2], %s293
        // Predicated region
        $region33: #{tpu_custom_call.1} parent=27 // pred_check
          %p295 = pneg %p102
        $region34: #{tpu_custom_call.1} parent=27 // pred_check_branch
          %297 = sbr.rel (%p295) target = $region36
        $region35: #{tpu_custom_call.1} parent=27 // pred_region
          %s299 = ssub.s32 64, 64
          %300 = vsyncadd %s291, %s299
          %s301 = smul.addr %s20, 64
          %s302 = scalar_lea.hbm %s2, %s301
          %s304 = sshll.u32 %s294, 4
          %s305 = int_to_ptr.vmem [resolvable:$true] %s304
          %307 = dma.vmem_to_hbm [thread:$0]  %s305, 64, %s302, %s291
        $region36: #{tpu_custom_call.1} parent=27 // pred_fallthru
          _
      $region28: #{tpu_custom_call.1} parent=5 // pred_fallthru
        _
      %p308 = scmp.le.s32.totalorder 2, %s11
      // Predicated region
      $region37: #{tpu_custom_call.1} parent=5 // pred_check
        %p309 = pneg %p308
      $region38: #{tpu_custom_call.1} parent=5 // pred_check_branch
        %311 = sbr.rel (%p309) target = $region40
      $region39: #{tpu_custom_call.1} parent=5 // pred_region
        %s312 = ssub.s32 %s11, 2
        // Predicated region
        $region41: #{tpu_custom_call.1} parent=39 // pred_check
          %p313 = pneg %p108
        $region42: #{tpu_custom_call.1} parent=39 // pred_check_branch
          %315 = sbr.rel (%p313) target = $region44
        $region43: #{tpu_custom_call.1} parent=39 // pred_region
          %s316 = sand.u32 %s93, 1
          %s317 = scalar_lea.sflag [#allocation3], %s316
          %s318 = sand.u32 %s93, 1
          %s319 = smul.addr %s318, 4
          %s320 = scalar_lea.vmem [#allocation2], %s319
          %321 = dma.done %s317, 64
        $region44: #{tpu_custom_call.1} parent=39 // pred_fallthru
          _
      $region40: #{tpu_custom_call.1} parent=5 // pred_fallthru
        _
    $region6: #{tpu_custom_call.1} parent=1 // loop_footer
      %s15 = sadd.s32 1, %s11
    $region7: #{tpu_custom_call.1} parent=1 // loop_footer_branch
      %10 = sbr.rel target = $region3
    $region8: #{tpu_custom_call.1} parent=1 // loop_exit
      _
    %322 = vsyncpa [#allocation3], 1
    %s323 = scalar_lea.sflag [#allocation3], 1
    %324 = vsyncpa %s323, 1

</llo_original>
